<compile_context>
chip_gen: v7x
topology: tpu7x:2x2x1
jax: 0.10.0
libtpu: 0.0.40
codegen_flags: <defaults>
</compile_context>

<pallas_src>
import functools

import jax
import jax.numpy as jnp
from jax.experimental import pallas as pl
from jax.experimental.pallas import tpu as pltpu


def eca_kernel(x_ref, w_ref, o_ref, acc_ref, *, hw, thw, tail, k_taps, pad,
               fuse_conv):
    """x_ref:   (TB, TC, THW) VMEM block of the flattened input,
       w_ref:   (K,) SMEM conv taps,
       o_ref:   (TB, TC) VMEM output block (resident across the spatial axis),
       acc_ref: (TB, TC, 128) f32 VMEM accumulator (resident across spatial axis).
       Static args: hw = H*W, thw = spatial block width, tail = valid columns in
       the last spatial block, k_taps/pad = conv taps / padding, fuse_conv =
       apply the channel conv in the finalize (requires full C in the block)."""
    s = pl.program_id(2)
    n_s = pl.num_programs(2)

    @pl.when(s == 0)
    def _init():
        acc_ref[...] = jnp.zeros_like(acc_ref)

    n_full = thw // 128
    rem = thw - n_full * 128          # > 0 only when thw == hw (single step)

    def _accumulate(valid_cols):
        # VPU-only steady state: lane-aligned chunk loads + adds, no lane reduce.
        partial = None
        for j in range(n_full):
            lo = j * 128
            if lo >= valid_cols:
                break                                  # chunk fully past the tail
            chunk = x_ref[:, :, lo:lo + 128].astype(jnp.float32)
            if lo + 128 > valid_cols:                  # chunk straddles the tail
                lane = jax.lax.broadcasted_iota(jnp.int32, chunk.shape, 2)
                chunk = jnp.where(lane < (valid_cols - lo), chunk, 0.0)
            partial = chunk if partial is None else partial + chunk
        if rem > 0:
            # Sub-128-lane remainder: only possible when thw == hw (single
            # spatial step), so this lane reduce runs once per (b, c) tile.
            tail_chunk = x_ref[:, :, n_full * 128:thw].astype(jnp.float32)
            tail_sum = jnp.sum(tail_chunk, axis=-1, keepdims=True)  # (TB, TC, 1)
            lane = jax.lax.broadcasted_iota(jnp.int32, acc_ref.shape, 2)
            tail_vec = jnp.where(lane == 0, tail_sum, 0.0)
            partial = tail_vec if partial is None else partial + tail_vec
        acc_ref[...] += partial

    if tail == thw:
        # Block width divides H*W: no masking anywhere.
        _accumulate(thw)
    else:
        @pl.when(s != n_s - 1)
        def _plain_step():
            _accumulate(thw)

        @pl.when(s == n_s - 1)
        def _masked_tail_step():
            _accumulate(tail)

    @pl.when(s == n_s - 1)
    def _finalize():
        # Single cross-lane reduce of the 128-lane accumulator (epilogue only).
        y = jnp.sum(acc_ref[...], axis=-1) * (1.0 / hw)      # (TB, TC) f32 mean
        if fuse_conv:
            c = y.shape[-1]
            if pad > 0:
                z = jnp.zeros((y.shape[0], pad), jnp.float32)
                yp = jnp.concatenate([z, y, z], axis=-1)     # zero-padded channels
            else:
                yp = y
            # PyTorch Conv1d (cross-correlation, no bias) along the channel axis:
            #   out[:, i] = sum_j w[j] * y[:, i + j - pad]
            out = w_ref[0] * yp[:, 0:c]
            for j in range(1, k_taps):
                out = out + w_ref[j] * yp[:, j:j + c]
            o_ref[...] = out.astype(o_ref.dtype)
        else:
            o_ref[...] = y.astype(o_ref.dtype)


def _vmem_capacity_bytes():
    try:
        return int(pltpu.get_tpu_info().vmem_capacity_bytes)
    except Exception:
        return 64 * 1024 * 1024       # conservative fallback (v7x per-TensorCore)


def eca_forward(x, weight, *, max_block_cols=None):
    """x: (B, C, H, W) NCHW, weight: (K,) Conv1d taps.  Returns (B, C)."""
    B, C, H, W = x.shape
    HW = H * W
    K = int(weight.shape[0])
    assert K % 2 == 1, "eca_layer uses an odd kernel_size"
    pad = (K - 1) // 2
    x_flat = x.reshape(B, C, HW)
    itemsize = jnp.dtype(x.dtype).itemsize

    # ----- tiling -------------------------------------------------------------
    # Batch tile: keep the sublane dim of the (TB, TC) output block legal
    # (multiple of 8, or the full batch).
    TB = 8 if (B > 8 and B % 8 == 0) else B
    nB = B // TB

    # v7x dual-TC: if the batch axis doesn't split, split channels into two
    # "parallel" tiles (lane-legal only when C % 256 == 0) and move the tiny
    # K-tap conv to the wrapper so the kernel needs no channel halo.
    if nB == 1 and C % 256 == 0:
        nC, TC = 2, C // 2
        fuse_conv = False
    else:
        nC, TC = 1, C
        fuse_conv = True

    # Spatial tile: prefer THW == HW (one contiguous row per (b, c)); otherwise
    # a multiple of 128 lanes sized from a generation-aware VMEM budget, rows
    # kept >= 512 B and the unrolled chunk count bounded (<= 64 chunks).
    vmem_cap = _vmem_capacity_bytes()
    min_cols = 128 if itemsize >= 4 else 256
    if max_block_cols is None:
        budget = 8 * 1024 * 1024 if vmem_cap >= (96 << 20) else 6 * 1024 * 1024
        cols = (budget // (TB * TC * itemsize)) // 128 * 128
        max_block_cols = max(min_cols, min(int(cols), 64 * 128))
    else:
        max_block_cols = max(min_cols, (int(max_block_cols) // 128) * 128)
    THW = HW if HW <= max_block_cols else int(max_block_cols)

    nS = pl.cdiv(HW, THW)
    tail = HW - (nS - 1) * THW        # valid columns in the last spatial block

    kernel = functools.partial(
        eca_kernel, hw=HW, thw=THW, tail=tail, k_taps=K, pad=pad,
        fuse_conv=fuse_conv)

    out_dtype = x.dtype if fuse_conv else jnp.float32
    vmem_limit = int(min(max(vmem_cap // 2, 48 << 20), 96 << 20))

    grid_spec = pltpu.PrefetchScalarGridSpec(
        num_scalar_prefetch=0,
        grid=(nB, nC, nS),
        in_specs=[
            pl.BlockSpec((TB, TC, THW), lambda b, c, s: (b, c, s)),   # x stream
            pl.BlockSpec(memory_space=pltpu.MemorySpace.SMEM),        # conv taps
        ],
        out_specs=pl.BlockSpec((TB, TC), lambda b, c, s: (b, c)),     # resident
        scratch_shapes=[pltpu.VMEM((TB, TC, 128), jnp.float32)],
    )

    pooled = pl.pallas_call(
        kernel,
        out_shape=jax.ShapeDtypeStruct((B, C), out_dtype),
        grid_spec=grid_spec,
        compiler_params=pltpu.CompilerParams(
            dimension_semantics=("parallel", "parallel", "arbitrary"),
            vmem_limit_bytes=vmem_limit),
    )(x_flat, weight)

    if fuse_conv:
        return pooled

    # Channel-tiled path: pooled means come back un-convolved; apply the K-tap
    # channel conv on the tiny (B, C) vector here (negligible work).
    yp = jnp.pad(pooled, ((0, 0), (pad, pad)))
    out = weight[0] * yp[:, 0:C]
    for j in range(1, K):
        out = out + weight[j] * yp[:, j:j + C]
    return out.astype(x.dtype)


def init_conv1d_weight(key, kernel_size):
    # PyTorch Conv1d default init: U(-1/sqrt(fan_in), 1/sqrt(fan_in)),
    # fan_in = in_channels * kernel_size = kernel_size here.
    bound = 1.0 / jnp.sqrt(jnp.float32(kernel_size))
    return jax.random.uniform(
        key, (kernel_size,), jnp.float32, minval=-bound, maxval=bound)


def eca_reference(x, weight):
    # Pure-JAX reference used only for correctness assertions.
    B, C, H, W = x.shape
    K = weight.shape[0]
    pad = (K - 1) // 2
    y = jnp.mean(x.astype(jnp.float32), axis=(2, 3))          # (B, C)
    ypad = jnp.pad(y, ((0, 0), (pad, pad)))
    out = jnp.zeros((B, C), jnp.float32)
    for j in range(K):
        out = out + weight[j] * ypad[:, j:j + C]
    return out.astype(x.dtype)


if __name__ == "__main__":
    key = jax.random.PRNGKey(0)
    kx, kw, kx2, kx3 = jax.random.split(key, 4)

    kernel_size = 3
    weight = init_conv1d_weight(kw, kernel_size)

    # 1) Small shape from the module spec: single spatial step, fused in-kernel conv.
    B, C, H, W = 2, 4, 16, 16
    x = jax.random.normal(kx, (B, C, H, W), dtype=jnp.float32)
    out = jax.block_until_ready(eca_forward(x, weight))
    ref = eca_reference(x, weight)
    assert out.shape == (B, C)
    assert jnp.allclose(out, ref, atol=1e-5, rtol=1e-5)

    # 2) Batch tiling (TB=8, nB=2), multi-step spatial streaming with the
    #    VPU-only accumulator, masked straddling chunk + statically skipped
    #    fully-OOB chunk on the ragged tail (forced 256-column blocks).
    B2, C2, H2, W2 = 16, 8, 16, 20
    x2 = jax.random.normal(kx2, (B2, C2, H2, W2), dtype=jnp.float32)
    out2 = jax.block_until_ready(eca_forward(x2, weight, max_block_cols=256))
    ref2 = eca_reference(x2, weight)
    assert jnp.allclose(out2, ref2, atol=1e-5, rtol=1e-5)

    # 3) nB == 1 with C % 256 == 0 -> channel-tiled "parallel" path (conv applied
    #    in the wrapper), plus the sub-128-lane remainder path (HW = 64).
    B3, C3, H3, W3 = 4, 256, 8, 8
    x3 = jax.random.normal(kx3, (B3, C3, H3, W3), dtype=jnp.float32)
    out3 = jax.block_until_ready(eca_forward(x3, weight))
    ref3 = eca_reference(x3, weight)
    assert jnp.allclose(out3, ref3, atol=1e-5, rtol=1e-5)

    print("KERNEL_OK")
</pallas_src>

<mosaic_0001>
module attributes {stable_mosaic.version = 11 : i64} {
  func.func @eca_kernel(%arg0: i32, %arg1: i32, %arg2: i32, %arg3: memref<2x4x256xf32, #tpu.memory_space<vmem>>, %arg4: memref<3xf32, #tpu.memory_space<smem>>, %arg5: memref<2x4xf32, #tpu.memory_space<vmem>>, %arg6: memref<2x4x128xf32, #tpu.memory_space<vmem>>) attributes {dimension_semantics = [#tpu.dimension_semantics<parallel>, #tpu.dimension_semantics<parallel>, #tpu.dimension_semantics<arbitrary>], iteration_bounds = array<i64: 1, 1, 1>, scalar_prefetch = 0 : i64, scratch_operands = 1 : i64, tpu.core_type = #tpu.core_type<tc>, window_params = [{transform_indices = @transform_0, window_bounds = array<i64: 2, 4, 256>}, {transform_indices = @transform_1, window_bounds = array<i64: 3>}, {transform_indices = @transform_2, window_bounds = array<i64: 2, 4>}]} {
    %c0_i32 = arith.constant 0 : i32
    %0 = arith.cmpi eq, %arg2, %c0_i32 : i32
    %1 = arith.extui %0 : i1 to i32
    %c0_i32_0 = arith.constant 0 : i32
    %2 = arith.cmpi ne, %1, %c0_i32_0 : i32
    scf.if %2 {
      %cst = arith.constant 0.000000e+00 : f32
      %12 = vector.broadcast %cst : f32 to vector<2x4x128xf32>
      %c0_13 = arith.constant 0 : index
      %c0_14 = arith.constant 0 : index
      %c0_15 = arith.constant 0 : index
      %13 = vector.load %arg6[%c0_13, %c0_14, %c0_15] : memref<2x4x128xf32, #tpu.memory_space<vmem>>, vector<2x4x128xf32>
      tpu.vector_store %arg6[%c0_13, %c0_14, %c0_15], %12 {strides = array<i32>} : memref<2x4x128xf32, #tpu.memory_space<vmem>>, vector<2x4x128xf32>,
    } else {
    }
    %c0 = arith.constant 0 : index
    %c0_1 = arith.constant 0 : index
    %c0_2 = arith.constant 0 : index
    %3 = vector.load %arg3[%c0, %c0_1, %c0_2] : memref<2x4x256xf32, #tpu.memory_space<vmem>>, vector<2x4x128xf32>
    %c0_3 = arith.constant 0 : index
    %c0_4 = arith.constant 0 : index
    %c128 = arith.constant 128 : index
    %4 = vector.load %arg3[%c0_3, %c0_4, %c128] : memref<2x4x256xf32, #tpu.memory_space<vmem>>, vector<2x4x128xf32>
    %5 = arith.addf %3, %4 : vector<2x4x128xf32>
    %c0_5 = arith.constant 0 : index
    %c0_6 = arith.constant 0 : index
    %c0_7 = arith.constant 0 : index
    %6 = vector.load %arg6[%c0_5, %c0_6, %c0_7] : memref<2x4x128xf32, #tpu.memory_space<vmem>>, vector<2x4x128xf32>
    %7 = arith.addf %6, %5 : vector<2x4x128xf32>
    %c0_8 = arith.constant 0 : index
    %c0_9 = arith.constant 0 : index
    %c0_10 = arith.constant 0 : index
    %8 = vector.load %arg6[%c0_8, %c0_9, %c0_10] : memref<2x4x128xf32, #tpu.memory_space<vmem>>, vector<2x4x128xf32>
    tpu.vector_store %arg6[%c0_8, %c0_9, %c0_10], %7 {strides = array<i32>} : memref<2x4x128xf32, #tpu.memory_space<vmem>>, vector<2x4x128xf32>,
    %c0_i32_11 = arith.constant 0 : i32
    %9 = arith.cmpi eq, %arg2, %c0_i32_11 : i32
    %10 = arith.extui %9 : i1 to i32
    %c0_i32_12 = arith.constant 0 : i32
    %11 = arith.cmpi ne, %10, %c0_i32_12 : i32
    scf.if %11 {
      %c0_13 = arith.constant 0 : index
      %c0_14 = arith.constant 0 : index
      %c0_15 = arith.constant 0 : index
      %12 = vector.load %arg6[%c0_13, %c0_14, %c0_15] : memref<2x4x128xf32, #tpu.memory_space<vmem>>, vector<2x4x128xf32>
      %cst = arith.constant dense<0.000000e+00> : vector<2x4xf32>
      %13 = vector.multi_reduction <add>, %12, %cst [2] : vector<2x4x128xf32> to vector<2x4xf32>
      %cst_16 = arith.constant 3.906250e-03 : f32
      %14 = vector.broadcast %cst_16 : f32 to vector<2x4xf32>
      %15 = arith.mulf %13, %14 : vector<2x4xf32>
      %cst_17 = arith.constant 0.000000e+00 : f32
      %16 = vector.broadcast %cst_17 : f32 to vector<2x1xf32>
      %17 = tpu.concatenate %16, %15, %16 in 1 : vector<2x1xf32>, vector<2x4xf32>, vector<2x1xf32> -> vector<2x6xf32>
      %c0_18 = arith.constant 0 : index
      %18 = memref.load %arg4[%c0_18] : memref<3xf32, #tpu.memory_space<smem>>
      %19 = vector.extract_strided_slice %17 {offsets = [0, 0], sizes = [2, 4], strides = [1, 1]} : vector<2x6xf32> to vector<2x4xf32>
      %20 = vector.broadcast %18 : f32 to vector<2x4xf32>
      %21 = arith.mulf %20, %19 : vector<2x4xf32>
      %c1 = arith.constant 1 : index
      %22 = memref.load %arg4[%c1] : memref<3xf32, #tpu.memory_space<smem>>
      %23 = vector.extract_strided_slice %17 {offsets = [0, 1], sizes = [2, 4], strides = [1, 1]} : vector<2x6xf32> to vector<2x4xf32>
      %24 = vector.broadcast %22 : f32 to vector<2x4xf32>
      %25 = arith.mulf %24, %23 : vector<2x4xf32>
      %26 = arith.addf %21, %25 : vector<2x4xf32>
      %c2 = arith.constant 2 : index
      %27 = memref.load %arg4[%c2] : memref<3xf32, #tpu.memory_space<smem>>
      %28 = vector.extract_strided_slice %17 {offsets = [0, 2], sizes = [2, 4], strides = [1, 1]} : vector<2x6xf32> to vector<2x4xf32>
      %29 = vector.broadcast %27 : f32 to vector<2x4xf32>
      %30 = arith.mulf %29, %28 : vector<2x4xf32>
      %31 = arith.addf %26, %30 : vector<2x4xf32>
      %c0_19 = arith.constant 0 : index
      %c0_20 = arith.constant 0 : index
      %32 = vector.load %arg5[%c0_19, %c0_20] : memref<2x4xf32, #tpu.memory_space<vmem>>, vector<2x4xf32>
      tpu.vector_store %arg5[%c0_19, %c0_20], %31 {strides = array<i32>} : memref<2x4xf32, #tpu.memory_space<vmem>>, vector<2x4xf32>,
    } else {
    }
    return
  }
  func.func @transform_0(%arg0: i32, %arg1: i32, %arg2: i32) -> (i32, i32, i32) {
    %c0_i32 = arith.constant 0 : i32
    return %arg0, %arg1, %arg2 : i32, i32, i32
  }
  func.func @transform_1(%arg0: i32, %arg1: i32, %arg2: i32) -> i32 {
    %c0_i32 = arith.constant 0 : i32
    %c0_i32_0 = arith.constant 0 : i32
    return %c0_i32 : i32
  }
  func.func @transform_2(%arg0: i32, %arg1: i32, %arg2: i32) -> (i32, i32) {
    %c0_i32 = arith.constant 0 : i32
    return %arg0, %arg1 : i32, i32
  }
}

</mosaic_0001>

<llo_original>
// kernel: tpu_custom_call.1
$region0: #{tpu_custom_call.1}
  #allocation0 [shape = 'u32[]', space=smem, size = 0x4, offset = 0x4, fixed_abs, tag = 'smem constant byte address 0x4 - core index']
  #allocation1 [shape = 'u32[144,128]{1,0:T(1,128)}', space=vmem, size = 0x12000, scoped, tag = 'internal scratch']
  #allocation2 [shape = 'f32[2,4,128]{2,1,0:T(4,128)}', space=vmem, size = 0x1000, scoped, tag = 'scratch operand']
  %s0 = inlined_call_operand.hbm [shape: f32[2,4,256], index: 0, kind: input, shape index: {}]
  %s1 = inlined_call_operand.vmem [shape: f32[3], index: 1, kind: input, shape index: {}]
  %s2 = inlined_call_operand.hbm [shape: f32[2,4], index: 2, kind: output, shape index: {}]
  %s3 = sld [smem:[#allocation0]]
  $region34: #{tpu_custom_call.1} parent=0
    _
  %s5 = ssub.s32 1, %s3
  %s6 = scalar_select 0, %s5, %s3
  $region1: #{tpu_custom_call.1} parent=0
    #allocation3 [shape = 'u8[8192]{0}', space=vmem, size = 0x2000, scoped, tag = 'input window, operand 0, single buffered']
    #allocation4 [shape = 's32[1]{0}', space=sflag, size = 0x4, scoped, tag = 'scoped memory for tpu_custom_call.1']
    #allocation5 [shape = 's32[1]{0}', space=sflag, size = 0x4, scoped, tag = 'scoped memory for tpu_custom_call.1']
    #allocation6 [shape = 's32[1]{0}', space=sflag, size = 0x4, scoped, tag = 'scoped memory for tpu_custom_call.1']
    #allocation7 [shape = 'u8[512]{0}', space=smem, size = 0x200, scoped, tag = 'input window, operand 1, single buffered']
    #allocation8 [shape = 'u8[1024]{0}', space=vmem, size = 0x400, scoped, tag = 'output window, operand 0, single buffered']
    %7 = vsyncpa [#allocation4], 0
    %8 = vsyncpa [#allocation6], 0
    %9 = vsyncpa [#allocation5], 0
    // Predicated region
    $region2: #{tpu_custom_call.1} parent=1 // pred_check
      _
    $region3: #{tpu_custom_call.1} parent=1 // pred_check_branch
      %11 = sbr.rel (0) target = $region5
    $region4: #{tpu_custom_call.1} parent=1 // pred_region
      %s13 = ssub.s32 256, 256
      %14 = vsyncadd [#allocation4], %s13
      %s15 = sshll.u32 [#allocation3], 4
      %s16 = int_to_ptr.vmem [resolvable:$true] %s15
      %21 = dma.hbm_to_vmem [thread:$0]  %s0, 256, %s16, [#allocation4], 128, 128, 8
    $region5: #{tpu_custom_call.1} parent=1 // pred_fallthru
      _
    // Predicated region
    $region6: #{tpu_custom_call.1} parent=1 // pred_check
      _
    $region7: #{tpu_custom_call.1} parent=1 // pred_check_branch
      %23 = sbr.rel (0) target = $region9
    $region8: #{tpu_custom_call.1} parent=1 // pred_region
      %s25 = ssub.s32 16, 16
      %26 = vsyncadd [#allocation6], %s25
      %s28 = sshll.u32 %s1, 4
      %s29 = int_to_ptr.vmem [resolvable:$true] %s28
      %31 = dma.vmem_to_smem %s29, 16, [#allocation7], [#allocation6]
    $region9: #{tpu_custom_call.1} parent=1 // pred_fallthru
      _
    // Predicated region
    $region10: #{tpu_custom_call.1} parent=1 // pred_check
      _
    $region11: #{tpu_custom_call.1} parent=1 // pred_check_branch
      %33 = sbr.rel (0) target = $region13
    $region12: #{tpu_custom_call.1} parent=1 // pred_region
      %34 = dma.done [#allocation4], 256
    $region13: #{tpu_custom_call.1} parent=1 // pred_fallthru
      _
    // Predicated region
    $region14: #{tpu_custom_call.1} parent=1 // pred_check
      _
    $region15: #{tpu_custom_call.1} parent=1 // pred_check_branch
      %36 = sbr.rel (0) target = $region17
    $region16: #{tpu_custom_call.1} parent=1 // pred_region
      %37 = dma.done [#allocation6], 16
    $region17: #{tpu_custom_call.1} parent=1 // pred_fallthru
      _
    %38 = sfence
    %p39 = scmp.eq.s32.totalorder 0, 0
    // Predicated region
    $region18: #{tpu_custom_call.1} parent=1 // pred_check
      %p40 = pneg %p39
    $region19: #{tpu_custom_call.1} parent=1 // pred_check_branch
      %42 = sbr.rel (%p40) target = $region21
    $region20: #{tpu_custom_call.1} parent=1 // pred_region
      %43 = vst [vmem:[#allocation2] sm:$0xf] 0.0
      %44 = vst [vmem:[#allocation2 + $0x4] sm:$0xf] 0.0
    $region21: #{tpu_custom_call.1} parent=1 // pred_fallthru
      _
    %v45 = vld [vmem:[#allocation3] sm:$0xf]
    %v46 = vld [vmem:[#allocation3 + $0x8] sm:$0xf]
    %v47 = vld [vmem:[#allocation3 + $0x4] sm:$0xf]
    %v48 = vld [vmem:[#allocation3 + $0xc] sm:$0xf]
    %v49 = vadd.f32 %v45, %v47
    %v50 = vadd.f32 %v46, %v48
    %v51 = vld [vmem:[#allocation2] sm:$0xf]
    %v52 = vld [vmem:[#allocation2 + $0x4] sm:$0xf]
    %v53 = vadd.f32 %v51, %v49
    %v54 = vadd.f32 %v52, %v50
    %55 = vst [vmem:[#allocation2] sm:$0xf] %v53
    %56 = vst [vmem:[#allocation2 + $0x4] sm:$0xf] %v54
    // Predicated region
    $region22: #{tpu_custom_call.1} parent=1 // pred_check
      %p57 = pneg %p39
    $region23: #{tpu_custom_call.1} parent=1 // pred_check_branch
      %59 = sbr.rel (%p57) target = $region25
    $region24: #{tpu_custom_call.1} parent=1 // pred_region
      %v60 = vld [vmem:[#allocation2] sm:$0xf]
      %v61 = vld [vmem:[#allocation2 + $0x4] sm:$0xf]
      %vm62 = vcmask 1043456
      %v63 = vsel %vm62, %v60, 0.0
      %64 = vadd.xlane.f32.xlu0 %v63
      %v65 = vpop.xlane.xlu0 %64
      %v66 = vsel %vm62, %v61, 0.0
      %67 = vadd.xlane.f32.xlu0 %v66
      %v68 = vpop.xlane.xlu0 %67
      %v69 = vmul.f32 %v65, 0.00390625
      %v70 = vmul.f32 %v68, 0.00390625
      %v73 = vlaneseq
      %v74 = vand.u32 %v73, 127
      %v75 = vadd.s32 %v74, 4294967295
      %v76 = vlaneseq
      %v77 = vshrl.u32 %v76, 7
      %v78 = vsub.s32 %v75, %v77
      %v79 = vrot.slane %v69, %v78
      %v80 = vlaneseq
      %v81 = vshrl.u32 %v80, 7
      %v82 = vsub.s32 %v75, %v81
      %v83 = vrot.slane %v70, %v82
      %vm84 = vcmask 1041409
      %v85 = vsel %vm84, %v83, %v79
      %vm87 = vcmask 7168
      %v88 = vsel %vm87, 0.0, %v85
      %vm89 = vcmask 39936
      %v90 = vsel %vm89, %v88, 0.0
      %s91 = sld [smem:[#allocation7]]
      %v92 = vstv %s91
      %v93 = vmul.f32 %v92, %v90
      %s94 = sld [smem:[#allocation7 + $0x1]]
      %v95 = vstv %s94
      %v96 = vmul.f32 %v95, %v90
      %98 = vrot.lane.b32.xlu0 %v96, 127
      %v99 = vpop.permute.xlu0 %98
      %v101 = vadd.f32 %v93, %v99
      %s102 = sld [smem:[#allocation7 + $0x2]]
      %v103 = vstv %s102
      %v104 = vmul.f32 %v103, %v90
      %106 = vrot.lane.b32.xlu0 %v104, 126
      %v107 = vpop.permute.xlu0 %106
      %v109 = vadd.f32 %v101, %v107
      %vm110 = vcmask 25600
      %111 = vst.msk [vmem:[#allocation8] sm:$0x3] %vm110, %v109
    $region25: #{tpu_custom_call.1} parent=1 // pred_fallthru
      _
    // Predicated region
    $region26: #{tpu_custom_call.1} parent=1 // pred_check
      _
    $region27: #{tpu_custom_call.1} parent=1 // pred_check_branch
      %113 = sbr.rel (0) target = $region29
    $region28: #{tpu_custom_call.1} parent=1 // pred_region
      %s115 = ssub.s32 32, 32
      %116 = vsyncadd [#allocation5], %s115
      %s118 = sshll.u32 [#allocation8], 4
      %s119 = int_to_ptr.vmem [resolvable:$true] %s118
      %121 = dma.vmem_to_hbm [thread:$0]  %s119, 32, %s2, [#allocation5]
    $region29: #{tpu_custom_call.1} parent=1 // pred_fallthru
      _
    // Predicated region
    $region30: #{tpu_custom_call.1} parent=1 // pred_check
      _
    $region31: #{tpu_custom_call.1} parent=1 // pred_check_branch
      %123 = sbr.rel (0) target = $region33
    $region32: #{tpu_custom_call.1} parent=1 // pred_region
      %124 = dma.done [#allocation5], 32
    $region33: #{tpu_custom_call.1} parent=1 // pred_fallthru
      _
    %125 = vsyncpa [#allocation4], 1
    %126 = vsyncpa [#allocation5], 1
    %127 = vsyncpa [#allocation6], 1

</llo_original>
